<compile_context>
chip_gen: v7x
topology: tpu7x:2x2x1
jax: 0.10.0
libtpu: 0.0.40
codegen_flags: <defaults>
</compile_context>

<pallas_src>
import math

import jax
import jax.numpy as jnp
from jax.experimental import pallas as pl
from jax.experimental.pallas import tpu as pltpu

_HALF_LOG_2PI = 0.5 * math.log(2.0 * math.pi)

_LANES = 1024                    # canonical lane-dense width = 8 * 128
_TILE_BYTES = 2 * 1024 * 1024    # per-stream per-tile budget (v5e-safe)
_SMALL_BYTES = 1 * 1024 * 1024   # below this, plain jnp (fusible) beats a launch


# ---------------------------------------------------------------------------
# Specialized N(0, 1) log-prob kernel: out = -0.5 * x^2 - 0.5*log(2*pi)
# ---------------------------------------------------------------------------
def _std_log_prob_kernel(x_ref, out_ref):
    x = x_ref[...].astype(jnp.float32)           # upcast in-register (free on VPU)
    out_ref[...] = (-0.5 * x * x - _HALF_LOG_2PI).astype(out_ref.dtype)


def _pick_row_tile(rows, itemsize):
    """Row tile: multiple of 8, <= VMEM budget, and >= 2 grid steps when possible."""
    if rows <= 8:
        return rows                               # full extent: always legal
    row_bytes = _LANES * itemsize
    budget = max(8, (_TILE_BYTES // row_bytes) // 8 * 8)
    # Cap at ~half the rows (rounded up to a sublane multiple) so the grid has
    # at least 2 programs -> both v7x TensorCores get a share of the HBM BW.
    half = ((rows + 1) // 2 + 7) // 8 * 8
    return max(8, min(budget, half))


def std_normal_log_prob(x, *, min_pallas_bytes=_SMALL_BYTES):
    """Pallas-backed Normal(0, 1).log_prob(x), elementwise, any shape/dtype."""
    orig_shape = x.shape
    out_dtype = x.dtype if jnp.issubdtype(x.dtype, jnp.floating) else jnp.float32

    n = x.size
    total_bytes = n * jnp.dtype(x.dtype).itemsize
    if n == 0 or total_bytes < min_pallas_bytes:
        # Tiny / empty: let XLA fuse this into producers/consumers.
        xf = x.astype(jnp.float32)
        return (-0.5 * xf * xf - _HALF_LOG_2PI).astype(out_dtype)

    # Canonical lane-dense layout: flatten -> (rows, 1024), padding the tail.
    x_flat = x.reshape(-1)
    n_pad = pl.cdiv(n, _LANES) * _LANES
    if n_pad != n:
        x_flat = jnp.pad(x_flat, (0, n_pad - n))
    rows = n_pad // _LANES
    x2 = x_flat.reshape(rows, _LANES)

    tb = _pick_row_tile(rows, jnp.dtype(x.dtype).itemsize)
    grid = (pl.cdiv(rows, tb),)
    spec = pl.BlockSpec((tb, _LANES), lambda i: (i, 0))

    out2 = pl.pallas_call(
        _std_log_prob_kernel,
        out_shape=jax.ShapeDtypeStruct((rows, _LANES), out_dtype),
        grid=grid,
        in_specs=[spec],
        out_specs=spec,
        compiler_params=pltpu.CompilerParams(
            dimension_semantics=("parallel",)),
    )(x2)

    out_flat = out2.reshape(-1)
    if n_pad != n:
        out_flat = out_flat[:n]
    return out_flat.reshape(orig_shape)


# ---------------------------------------------------------------------------
# Python-side wrappers mirroring the torch module.
# ---------------------------------------------------------------------------
class StdNormalPdf:
    """Minimal stand-in for torch.distributions.Normal(0, 1) returned by forward()."""

    def __init__(self, loc, scale):
        self.loc = loc
        self.scale = scale

    def log_prob(self, x, *, min_pallas_bytes=_SMALL_BYTES):
        # loc == 0, scale == 1 by construction -> specialized Pallas kernel.
        return std_normal_log_prob(x, min_pallas_bytes=min_pallas_bytes)

    # TODO(synk): sample()/rsample() would need pltpu.prng_* inside a kernel;
    # not required by the module's forward(), so not implemented here.


class StdNormal:
    """JAX/Pallas port of hyperion StdNormal parameter storage."""

    def __init__(self, shape, dtype=jnp.float32):
        # Plain buffers (constants need no Pallas kernel / HBM round trip).
        self.loc = jnp.zeros(shape, dtype)
        self.scale = jnp.ones(shape, dtype)

    @property
    def pdf(self):
        return StdNormalPdf(self.loc, self.scale)

    def __call__(self):
        # forward(): returns the N(0, I) pdf object.
        return self.pdf


if __name__ == "__main__":
    shape = (16, 256)  # small, lane-aligned parameter shape
    module = StdNormal(shape)

    dist = module()  # forward pass
    jax.block_until_ready(dist.loc)
    jax.block_until_ready(dist.scale)
    assert bool(jnp.allclose(dist.loc, 0.0))
    assert bool(jnp.allclose(dist.scale, 1.0))

    key = jax.random.PRNGKey(0)
    k1, k2 = jax.random.split(key)

    # 1) Module-consistent small shape: takes the fused-jnp fast path.
    x_small = jax.random.normal(k1, shape, dtype=jnp.float32)
    lp_small = dist.log_prob(x_small)
    jax.block_until_ready(lp_small)
    exp_small = -0.5 * x_small * x_small - _HALF_LOG_2PI
    assert lp_small.dtype == x_small.dtype
    assert bool(jnp.allclose(lp_small, exp_small, atol=1e-5))

    # 2) Force the Pallas kernel on the same small shape (covers the padded
    #    tail + rows<=8 full-extent block path).
    lp_forced = dist.log_prob(x_small, min_pallas_bytes=0)
    jax.block_until_ready(lp_forced)
    assert bool(jnp.allclose(lp_forced, exp_small, atol=1e-5))

    # 3) Awkward shape (lane-narrow last dim, size not a multiple of 1024,
    #    bf16): exercises canonical flatten-to-1024, tail padding, >=2 grid
    #    steps and partial-last-block masking in the Pallas path.
    x_odd = jax.random.normal(k2, (40, 1000), dtype=jnp.bfloat16)
    lp_odd = dist.log_prob(x_odd, min_pallas_bytes=0)
    jax.block_until_ready(lp_odd)
    exp_odd = (-0.5 * x_odd.astype(jnp.float32) ** 2
               - _HALF_LOG_2PI).astype(jnp.bfloat16)
    assert lp_odd.dtype == jnp.bfloat16
    assert bool(jnp.allclose(lp_odd.astype(jnp.float32),
                             exp_odd.astype(jnp.float32),
                             atol=1e-2, rtol=1e-2))

    print("KERNEL_OK")
</pallas_src>

<mosaic_0001>
module attributes {stable_mosaic.version = 11 : i64} {
  func.func @_std_log_prob_kernel(%arg0: i32, %arg1: memref<4x1024xf32, #tpu.memory_space<vmem>>, %arg2: memref<4x1024xf32, #tpu.memory_space<vmem>>) attributes {dimension_semantics = [#tpu.dimension_semantics<parallel>], iteration_bounds = array<i64: 1>, scalar_prefetch = 0 : i64, scratch_operands = 0 : i64, tpu.core_type = #tpu.core_type<tc>, window_params = [{transform_indices = @transform_0, window_bounds = array<i64: 4, 1024>}, {transform_indices = @transform_1, window_bounds = array<i64: 4, 1024>}]} {
    %c0 = arith.constant 0 : index
    %c0_0 = arith.constant 0 : index
    %0 = vector.load %arg1[%c0, %c0_0] : memref<4x1024xf32, #tpu.memory_space<vmem>>, vector<4x1024xf32>
    %cst = arith.constant -5.000000e-01 : f32
    %1 = vector.broadcast %cst : f32 to vector<4x1024xf32>
    %2 = arith.mulf %1, %0 : vector<4x1024xf32>
    %3 = arith.mulf %2, %0 : vector<4x1024xf32>
    %cst_1 = arith.constant 0.918938517 : f32
    %4 = vector.broadcast %cst_1 : f32 to vector<4x1024xf32>
    %5 = arith.subf %3, %4 : vector<4x1024xf32>
    %c0_2 = arith.constant 0 : index
    %c0_3 = arith.constant 0 : index
    %6 = vector.load %arg2[%c0_2, %c0_3] : memref<4x1024xf32, #tpu.memory_space<vmem>>, vector<4x1024xf32>
    tpu.vector_store %arg2[%c0_2, %c0_3], %5 {strides = array<i32>} : memref<4x1024xf32, #tpu.memory_space<vmem>>, vector<4x1024xf32>,
    return
  }
  func.func @transform_0(%arg0: i32) -> (i32, i32) {
    %c0_i32 = arith.constant 0 : i32
    %c0_i32_0 = arith.constant 0 : i32
    return %arg0, %c0_i32 : i32, i32
  }
  func.func @transform_1(%arg0: i32) -> (i32, i32) {
    %c0_i32 = arith.constant 0 : i32
    %c0_i32_0 = arith.constant 0 : i32
    return %arg0, %c0_i32 : i32, i32
  }
}

</mosaic_0001>

<llo_original>
// kernel: tpu_custom_call.1
$region0: #{tpu_custom_call.1}
  #allocation0 [shape = 'u32[]', space=smem, size = 0x4, offset = 0x4, fixed_abs, tag = 'smem constant byte address 0x4 - core index']
  #allocation1 [shape = 'u32[144,128]{1,0:T(1,128)}', space=vmem, size = 0x12000, scoped, tag = 'internal scratch']
  %s0 = inlined_call_operand.hbm [shape: f32[4,1024], index: 0, kind: input, shape index: {}]
  %s1 = inlined_call_operand.hbm [shape: f32[4,1024], index: 1, kind: output, shape index: {}]
  %s2 = sld [smem:[#allocation0]]
  $region18: #{tpu_custom_call.1} parent=0
    _
  %s4 = ssub.s32 1, %s2
  %s5 = scalar_select 0, %s4, %s2
  $region1: #{tpu_custom_call.1} parent=0
    #allocation2 [shape = 'u8[16384]{0}', space=vmem, size = 0x4000, scoped, tag = 'input window, operand 0, single buffered']
    #allocation3 [shape = 's32[1]{0}', space=sflag, size = 0x4, scoped, tag = 'scoped memory for tpu_custom_call.1']
    #allocation4 [shape = 's32[1]{0}', space=sflag, size = 0x4, scoped, tag = 'scoped memory for tpu_custom_call.1']
    #allocation5 [shape = 'u8[16384]{0}', space=vmem, size = 0x4000, scoped, tag = 'output window, operand 0, single buffered']
    %6 = vsyncpa [#allocation3], 0
    %7 = vsyncpa [#allocation4], 0
    // Predicated region
    $region2: #{tpu_custom_call.1} parent=1 // pred_check
      _
    $region3: #{tpu_custom_call.1} parent=1 // pred_check_branch
      %9 = sbr.rel (0) target = $region5
    $region4: #{tpu_custom_call.1} parent=1 // pred_region
      %s11 = ssub.s32 512, 512
      %12 = vsyncadd [#allocation3], %s11
      %s14 = sshll.u32 [#allocation2], 4
      %s15 = int_to_ptr.vmem [resolvable:$true] %s14
      %17 = dma.hbm_to_vmem [thread:$0]  %s0, 512, %s15, [#allocation3]
    $region5: #{tpu_custom_call.1} parent=1 // pred_fallthru
      _
    // Predicated region
    $region6: #{tpu_custom_call.1} parent=1 // pred_check
      _
    $region7: #{tpu_custom_call.1} parent=1 // pred_check_branch
      %19 = sbr.rel (0) target = $region9
    $region8: #{tpu_custom_call.1} parent=1 // pred_region
      %20 = dma.done [#allocation3], 512
    $region9: #{tpu_custom_call.1} parent=1 // pred_fallthru
      _
    %v21 = vld [vmem:[#allocation2] sm:$0xff]
    %v22 = vld [vmem:[#allocation2 + $0x8] sm:$0xff]
    %v23 = vld [vmem:[#allocation2 + $0x10] sm:$0xff]
    %v24 = vld [vmem:[#allocation2 + $0x18] sm:$0xff]
    %v25 = vmul.f32 %v21, -0.5
    %v26 = vmul.f32 %v22, -0.5
    %v27 = vmul.f32 %v23, -0.5
    %v28 = vmul.f32 %v24, -0.5
    %v29 = vmul.f32 %v25, %v21
    %v30 = vmul.f32 %v26, %v22
    %v31 = vmul.f32 %v27, %v23
    %v32 = vmul.f32 %v28, %v24
    %v33 = vsub.f32 %v29, 0.9189385
    %v34 = vsub.f32 %v30, 0.9189385
    %v35 = vsub.f32 %v31, 0.9189385
    %v36 = vsub.f32 %v32, 0.9189385
    %37 = vst [vmem:[#allocation5] sm:$0xff] %v33
    %38 = vst [vmem:[#allocation5 + $0x8] sm:$0xff] %v34
    %39 = vst [vmem:[#allocation5 + $0x10] sm:$0xff] %v35
    %40 = vst [vmem:[#allocation5 + $0x18] sm:$0xff] %v36
    // Predicated region
    $region10: #{tpu_custom_call.1} parent=1 // pred_check
      _
    $region11: #{tpu_custom_call.1} parent=1 // pred_check_branch
      %42 = sbr.rel (0) target = $region13
    $region12: #{tpu_custom_call.1} parent=1 // pred_region
      %s44 = ssub.s32 512, 512
      %45 = vsyncadd [#allocation4], %s44
      %s47 = sshll.u32 [#allocation5], 4
      %s48 = int_to_ptr.vmem [resolvable:$true] %s47
      %50 = dma.vmem_to_hbm [thread:$0]  %s48, 512, %s1, [#allocation4]
    $region13: #{tpu_custom_call.1} parent=1 // pred_fallthru
      _
    // Predicated region
    $region14: #{tpu_custom_call.1} parent=1 // pred_check
      _
    $region15: #{tpu_custom_call.1} parent=1 // pred_check_branch
      %52 = sbr.rel (0) target = $region17
    $region16: #{tpu_custom_call.1} parent=1 // pred_region
      %53 = dma.done [#allocation4], 512
    $region17: #{tpu_custom_call.1} parent=1 // pred_fallthru
      _
    %54 = vsyncpa [#allocation3], 1
    %55 = vsyncpa [#allocation4], 1

</llo_original>
